<compile_context>
chip_gen: v5e
topology: v5e:2x2
jax: 0.10.0
libtpu: 0.0.40
codegen_flags: <defaults>
</compile_context>

<pallas_src>
import jax
import jax.numpy as jnp
from jax.experimental import pallas as pl
from jax.experimental.pallas import tpu as pltpu


def _pick_tile(HWf, C, Hs, Ws):
    """Largest output-pixel tile (multiple of 128) that divides HWf and fits VMEM."""
    if HWf % 128 != 0:
        return HWf  # full-extent last dim is always a legal BlockSpec
    # Per-step live f32 bytes: inter (C*Hs,t) + tx (Ws,t) + ty (Hs,t) + a few (1,t)
    # temporaries, double-buffered flow (2,t) and out (C,t) blocks, plus the
    # (constant-index) src block.  Budget against v7x's 32 MiB default scoped VMEM
    # (64 MiB physical), NOT the 128 MiB of v5e/v6e.
    budget = 32 * 1024 * 1024
    fixed = 4 * 2 * C * Hs * Ws
    for cand in (2048, 1024, 512, 256, 128):
        if HWf % cand != 0:
            continue
        live = fixed + 4 * cand * (C * Hs + Ws + 2 * Hs + 2 * (2 + C) + 8)
        if live <= budget:
            return cand
    return 128


def _make_kernel(C, Hs, Ws, Hf, Wf, tile):
    # align_corners=True: normalize-against-flow-dims then denormalize-against-src-dims
    # is a constant per-axis scale (elided below when it is exactly 1.0).
    scale_y = (Hs - 1.0) / (Hf - 1.0) if Hf > 1 else 0.0
    scale_x = (Ws - 1.0) / (Wf - 1.0) if Wf > 1 else 0.0

    def kernel(src_ref, flow_ref, out_ref):
        # src_ref : (C*Hs, Ws)   source image, channels*rows on sublanes
        # flow_ref: (2, tile)    flow[0] = row displacement, flow[1] = col displacement
        # out_ref : (C, tile)    lane-dense output tile (tile % 128 == 0 or == HWf)
        j = pl.program_id(1)

        flow = flow_ref[...].astype(jnp.float32)

        # ---- base grid for this tile, generated in-kernel ---------------------
        p = jax.lax.broadcasted_iota(jnp.int32, (1, tile), 1) + j * tile
        pf = p.astype(jnp.float32)                    # exact for HWf < 2**24
        yb = jnp.floor(pf / Wf)
        xb = pf - yb * Wf
        # one-step correction for the (at most one) f32 rounding slip in the divide
        lo = xb < 0.0
        yb = jnp.where(lo, yb - 1.0, yb)
        xb = jnp.where(lo, xb + Wf, xb)
        hi = xb >= Wf
        yb = jnp.where(hi, yb + 1.0, yb)
        xb = jnp.where(hi, xb - Wf, xb)

        # ---- sample coordinates ------------------------------------------------
        y = yb + flow[0:1, :]
        x = xb + flow[1:2, :]
        if scale_y != 1.0:
            y = y * scale_y
        if scale_x != 1.0:
            x = x * scale_x

        y0f = jnp.floor(y)
        x0f = jnp.floor(x)
        wy = y - y0f
        wx = x - x0f
        y0 = y0f.astype(jnp.int32)
        x0 = x0f.astype(jnp.int32)

        # ---- horizontal (x) one-hot weights: tx (Ws, tile) ----------------------
        # out-of-range taps get zero weight => padding_mode='zeros'
        wx0 = jnp.where((x0 >= 0) & (x0 < Ws), 1.0 - wx, 0.0)          # (1, tile)
        wx1 = jnp.where((x0 + 1 >= 0) & (x0 + 1 < Ws), wx, 0.0)        # (1, tile)
        dx = jax.lax.broadcasted_iota(jnp.int32, (Ws, tile), 0) - x0   # (Ws, tile)
        tx = jnp.where(dx == 0, wx0, 0.0) + jnp.where(dx == 1, wx1, 0.0)

        # ---- x-interpolation on the MXU: (C*Hs, Ws) @ (Ws, tile) ----------------
        src = src_ref[...].astype(jnp.float32)
        inter = jnp.dot(src, tx, preferred_element_type=jnp.float32)   # (C*Hs, tile)

        # ---- vertical (y) one-hot weights and Hs-term combine -------------------
        wy0 = jnp.where((y0 >= 0) & (y0 < Hs), 1.0 - wy, 0.0)
        wy1 = jnp.where((y0 + 1 >= 0) & (y0 + 1 < Hs), wy, 0.0)
        dy = jax.lax.broadcasted_iota(jnp.int32, (Hs, tile), 0) - y0   # (Hs, tile)
        ty = jnp.where(dy == 0, wy0, 0.0) + jnp.where(dy == 1, wy1, 0.0)

        # reshape splits sublanes in groups of Hs (free when Hs % 8 == 0)
        out = jnp.sum(inter.reshape(C, Hs, tile) * ty[None, :, :], axis=1)  # (C, tile)
        out_ref[...] = out.astype(out_ref.dtype)

    return kernel


def spatial_transformer(src, flow, mode="bilinear"):
    """src: (N, C, Hs, Ws), flow: (N, 2, Hf, Wf)  ->  (N, C, Hf, Wf)."""
    if mode != "bilinear":
        # TODO(synk): mode='nearest' (round-to-nearest single tap) not implemented.
        raise NotImplementedError("only mode='bilinear' is implemented")
    N, C, Hs, Ws = src.shape
    Nf, D, Hf, Wf = flow.shape
    assert Nf == N and D == 2, "2-D flow of shape (N, 2, H, W) expected"
    HWf = Hf * Wf

    tile = _pick_tile(HWf, C, Hs, Ws)
    num_tiles = HWf // tile

    src_flat = src.reshape(N, C * Hs, Ws)      # merge leading dims: free, no transpose
    flow_flat = flow.reshape(N, 2, HWf)        # NCHW flattens lane-dense for free

    itemsize = jnp.dtype(src.dtype).itemsize
    cost = pl.CostEstimate(
        flops=N * (2 * C * Hs * Ws * HWf          # x-interp matmul
                   + 2 * C * Hs * HWf             # y-combine
                   + 8 * (Hs + Ws) * HWf),        # one-hot weight builds
        transcendentals=0,
        bytes_accessed=itemsize * N * (C * Hs * Ws + 2 * HWf + C * HWf),
    )

    out = pl.pallas_call(
        _make_kernel(C, Hs, Ws, Hf, Wf, tile),
        out_shape=jax.ShapeDtypeStruct((N, C, HWf), src.dtype),
        grid_spec=pltpu.PrefetchScalarGridSpec(
            num_scalar_prefetch=0,
            grid=(N, num_tiles),
            in_specs=[
                # src block index is constant over the inner tile loop -> fetched once per n
                pl.BlockSpec((pl.Squeezed(), C * Hs, Ws), lambda n, j: (n, 0, 0)),
                pl.BlockSpec((pl.Squeezed(), 2, tile), lambda n, j: (n, 0, j)),
            ],
            out_specs=pl.BlockSpec((pl.Squeezed(), C, tile), lambda n, j: (n, 0, j)),
        ),
        compiler_params=pltpu.CompilerParams(
            dimension_semantics=("parallel", "parallel"),
        ),
        cost_estimate=cost,
    )(src_flat, flow_flat)

    return out.reshape(N, C, Hf, Wf)


def _ref_forward(src, flow):
    # Pure-JAX reference of SpatialTransformer_block.forward
    # (bilinear, align_corners=True, padding_mode='zeros').
    N, C, Hs, Ws = src.shape
    _, _, Hf, Wf = flow.shape
    ii, jj = jnp.meshgrid(jnp.arange(Hf, dtype=jnp.float32),
                          jnp.arange(Wf, dtype=jnp.float32), indexing="ij")
    sy = (Hs - 1.0) / (Hf - 1.0) if Hf > 1 else 0.0
    sx = (Ws - 1.0) / (Wf - 1.0) if Wf > 1 else 0.0
    y = (ii[None] + flow[:, 0]) * sy
    x = (jj[None] + flow[:, 1]) * sx
    y0f = jnp.floor(y)
    x0f = jnp.floor(x)
    wy = y - y0f
    wx = x - x0f
    y0 = y0f.astype(jnp.int32)
    x0 = x0f.astype(jnp.int32)

    def tap(yi, xi, w):
        valid = (yi >= 0) & (yi < Hs) & (xi >= 0) & (xi < Ws)
        yc = jnp.clip(yi, 0, Hs - 1)
        xc = jnp.clip(xi, 0, Ws - 1)
        vals = jax.vmap(lambda s, yy, xx: s[:, yy, xx])(src, yc, xc)  # (N, C, Hf, Wf)
        return vals * (w * valid.astype(src.dtype))[:, None, :, :]

    return (tap(y0, x0, (1.0 - wy) * (1.0 - wx))
            + tap(y0, x0 + 1, (1.0 - wy) * wx)
            + tap(y0 + 1, x0, wy * (1.0 - wx))
            + tap(y0 + 1, x0 + 1, wy * wx))


if __name__ == "__main__":
    N, C, H, W = 2, 4, 16, 16

    key = jax.random.PRNGKey(0)
    k_src, k_flow = jax.random.split(key)
    src = jax.random.normal(k_src, (N, C, H, W), dtype=jnp.float32)
    # Displacement field of a few pixels; edge samples exercise the zero-padding path.
    flow = jax.random.normal(k_flow, (N, 2, H, W), dtype=jnp.float32) * 3.0

    out = jax.block_until_ready(spatial_transformer(src, flow))
    ref = jax.block_until_ready(_ref_forward(src, flow))

    assert out.shape == (N, C, H, W)
    assert jnp.allclose(out, ref, atol=1e-4, rtol=1e-4), "mismatch vs reference"

    print("KERNEL_OK")
</pallas_src>

<mosaic_0001>
module attributes {stable_mosaic.version = 11 : i64} {
  func.func @kernel(%arg0: i32, %arg1: i32, %arg2: memref<1x64x16xf32, #tpu.memory_space<vmem>>, %arg3: memref<1x2x256xf32, #tpu.memory_space<vmem>>, %arg4: memref<1x4x256xf32, #tpu.memory_space<vmem>>) attributes {dimension_semantics = [#tpu.dimension_semantics<parallel>, #tpu.dimension_semantics<parallel>], iteration_bounds = array<i64: 2, 1>, scalar_prefetch = 0 : i64, scratch_operands = 0 : i64, tpu.core_type = #tpu.core_type<tc>, window_params = [{transform_indices = @transform_0, window_bounds = array<i64: 1, 64, 16>}, {transform_indices = @transform_1, window_bounds = array<i64: 1, 2, 256>}, {transform_indices = @transform_2, window_bounds = array<i64: 1, 4, 256>}]} {
    %c0 = arith.constant 0 : index
    %c0_0 = arith.constant 0 : index
    %c0_1 = arith.constant 0 : index
    %0 = vector.load %arg3[%c0, %c0_0, %c0_1] : memref<1x2x256xf32, #tpu.memory_space<vmem>>, vector<1x2x256xf32>
    %1 = vector.shape_cast %0 : vector<1x2x256xf32> to vector<2x256xf32>
    %2 = tpu.iota {dimensions = array<i32: 1>} : vector<1x256xi32>
    %c256_i32 = arith.constant 256 : i32
    %3 = arith.muli %arg1, %c256_i32 : i32
    %4 = vector.broadcast %3 : i32 to vector<1x256xi32>
    %5 = arith.addi %2, %4 : vector<1x256xi32>
    %6 = arith.sitofp %5 : vector<1x256xi32> to vector<1x256xf32>
    %cst = arith.constant 1.600000e+01 : f32
    %7 = vector.broadcast %cst : f32 to vector<1x256xf32>
    %8 = arith.divf %6, %7 : vector<1x256xf32>
    %9 = math.floor %8 : vector<1x256xf32>
    %cst_2 = arith.constant 1.600000e+01 : f32
    %10 = vector.broadcast %cst_2 : f32 to vector<1x256xf32>
    %11 = arith.mulf %9, %10 : vector<1x256xf32>
    %12 = arith.subf %6, %11 : vector<1x256xf32>
    %cst_3 = arith.constant 0.000000e+00 : f32
    %13 = vector.broadcast %cst_3 : f32 to vector<1x256xf32>
    %14 = arith.cmpf olt, %12, %13 : vector<1x256xf32>
    %cst_4 = arith.constant 1.000000e+00 : f32
    %15 = vector.broadcast %cst_4 : f32 to vector<1x256xf32>
    %16 = arith.subf %9, %15 : vector<1x256xf32>
    %17 = arith.select %14, %16, %9 : vector<1x256xi1>, vector<1x256xf32>
    %cst_5 = arith.constant 1.600000e+01 : f32
    %18 = vector.broadcast %cst_5 : f32 to vector<1x256xf32>
    %19 = arith.addf %12, %18 : vector<1x256xf32>
    %20 = arith.select %14, %19, %12 : vector<1x256xi1>, vector<1x256xf32>
    %cst_6 = arith.constant 1.600000e+01 : f32
    %21 = vector.broadcast %cst_6 : f32 to vector<1x256xf32>
    %22 = arith.cmpf oge, %20, %21 : vector<1x256xf32>
    %cst_7 = arith.constant 1.000000e+00 : f32
    %23 = vector.broadcast %cst_7 : f32 to vector<1x256xf32>
    %24 = arith.addf %17, %23 : vector<1x256xf32>
    %25 = arith.select %22, %24, %17 : vector<1x256xi1>, vector<1x256xf32>
    %cst_8 = arith.constant 1.600000e+01 : f32
    %26 = vector.broadcast %cst_8 : f32 to vector<1x256xf32>
    %27 = arith.subf %20, %26 : vector<1x256xf32>
    %28 = arith.select %22, %27, %20 : vector<1x256xi1>, vector<1x256xf32>
    %29 = vector.extract_strided_slice %1 {offsets = [0, 0], sizes = [1, 256], strides = [1, 1]} : vector<2x256xf32> to vector<1x256xf32>
    %30 = arith.addf %25, %29 : vector<1x256xf32>
    %31 = vector.extract_strided_slice %1 {offsets = [1, 0], sizes = [1, 256], strides = [1, 1]} : vector<2x256xf32> to vector<1x256xf32>
    %32 = arith.addf %28, %31 : vector<1x256xf32>
    %33 = math.floor %30 : vector<1x256xf32>
    %34 = math.floor %32 : vector<1x256xf32>
    %35 = arith.subf %30, %33 : vector<1x256xf32>
    %36 = arith.subf %32, %34 : vector<1x256xf32>
    %37 = arith.fptosi %33 : vector<1x256xf32> to vector<1x256xi32>
    %38 = arith.fptosi %34 : vector<1x256xf32> to vector<1x256xi32>
    %c0_i32 = arith.constant 0 : i32
    %39 = vector.broadcast %c0_i32 : i32 to vector<1x256xi32>
    %40 = arith.cmpi sge, %38, %39 : vector<1x256xi32>
    %c16_i32 = arith.constant 16 : i32
    %41 = vector.broadcast %c16_i32 : i32 to vector<1x256xi32>
    %42 = arith.cmpi slt, %38, %41 : vector<1x256xi32>
    %43 = arith.andi %40, %42 : vector<1x256xi1>
    %cst_9 = arith.constant 1.000000e+00 : f32
    %44 = vector.broadcast %cst_9 : f32 to vector<1x256xf32>
    %45 = arith.subf %44, %36 : vector<1x256xf32>
    %cst_10 = arith.constant 0.000000e+00 : f32
    %46 = vector.broadcast %cst_10 : f32 to vector<1x256xf32>
    %47 = arith.select %43, %45, %46 : vector<1x256xi1>, vector<1x256xf32>
    %c1_i32 = arith.constant 1 : i32
    %48 = vector.broadcast %c1_i32 : i32 to vector<1x256xi32>
    %49 = arith.addi %38, %48 : vector<1x256xi32>
    %c0_i32_11 = arith.constant 0 : i32
    %50 = vector.broadcast %c0_i32_11 : i32 to vector<1x256xi32>
    %51 = arith.cmpi sge, %49, %50 : vector<1x256xi32>
    %c1_i32_12 = arith.constant 1 : i32
    %52 = vector.broadcast %c1_i32_12 : i32 to vector<1x256xi32>
    %53 = arith.addi %38, %52 : vector<1x256xi32>
    %c16_i32_13 = arith.constant 16 : i32
    %54 = vector.broadcast %c16_i32_13 : i32 to vector<1x256xi32>
    %55 = arith.cmpi slt, %53, %54 : vector<1x256xi32>
    %56 = arith.andi %51, %55 : vector<1x256xi1>
    %cst_14 = arith.constant 0.000000e+00 : f32
    %57 = vector.broadcast %cst_14 : f32 to vector<1x256xf32>
    %58 = arith.select %56, %36, %57 : vector<1x256xi1>, vector<1x256xf32>
    %59 = tpu.iota {dimensions = array<i32: 0>} : vector<16x256xi32>
    %60 = vector.broadcast %38 : vector<1x256xi32> to vector<16x256xi32>
    %61 = arith.subi %59, %60 : vector<16x256xi32>
    %c0_i32_15 = arith.constant 0 : i32
    %62 = vector.broadcast %c0_i32_15 : i32 to vector<16x256xi32>
    %63 = arith.cmpi eq, %61, %62 : vector<16x256xi32>
    %cst_16 = arith.constant 0.000000e+00 : f32
    %64 = vector.shape_cast %47 : vector<1x256xf32> to vector<1x256xf32>
    %65 = vector.broadcast %64 : vector<1x256xf32> to vector<16x256xf32>
    %66 = vector.broadcast %cst_16 : f32 to vector<16x256xf32>
    %67 = arith.select %63, %65, %66 : vector<16x256xi1>, vector<16x256xf32>
    %c1_i32_17 = arith.constant 1 : i32
    %68 = vector.broadcast %c1_i32_17 : i32 to vector<16x256xi32>
    %69 = arith.cmpi eq, %61, %68 : vector<16x256xi32>
    %cst_18 = arith.constant 0.000000e+00 : f32
    %70 = vector.shape_cast %58 : vector<1x256xf32> to vector<1x256xf32>
    %71 = vector.broadcast %70 : vector<1x256xf32> to vector<16x256xf32>
    %72 = vector.broadcast %cst_18 : f32 to vector<16x256xf32>
    %73 = arith.select %69, %71, %72 : vector<16x256xi1>, vector<16x256xf32>
    %74 = arith.addf %67, %73 : vector<16x256xf32>
    %c0_19 = arith.constant 0 : index
    %c0_20 = arith.constant 0 : index
    %c0_21 = arith.constant 0 : index
    %75 = vector.load %arg2[%c0_19, %c0_20, %c0_21] : memref<1x64x16xf32, #tpu.memory_space<vmem>>, vector<1x64x16xf32>
    %76 = vector.shape_cast %75 : vector<1x64x16xf32> to vector<64x16xf32>
    %cst_22 = arith.constant dense<0.000000e+00> : vector<64x256xf32>
    %77 = tpu.matmul %76, %74, %cst_22 {dimension_numbers = #tpu.dot_dimension_numbers<[1], [0], [0], [1], [0, 0, 1, 1], [], []>} : vector<64x16xf32>, vector<16x256xf32>, vector<64x256xf32> -> vector<64x256xf32>
    %c0_i32_23 = arith.constant 0 : i32
    %78 = vector.broadcast %c0_i32_23 : i32 to vector<1x256xi32>
    %79 = arith.cmpi sge, %37, %78 : vector<1x256xi32>
    %c16_i32_24 = arith.constant 16 : i32
    %80 = vector.broadcast %c16_i32_24 : i32 to vector<1x256xi32>
    %81 = arith.cmpi slt, %37, %80 : vector<1x256xi32>
    %82 = arith.andi %79, %81 : vector<1x256xi1>
    %cst_25 = arith.constant 1.000000e+00 : f32
    %83 = vector.broadcast %cst_25 : f32 to vector<1x256xf32>
    %84 = arith.subf %83, %35 : vector<1x256xf32>
    %cst_26 = arith.constant 0.000000e+00 : f32
    %85 = vector.broadcast %cst_26 : f32 to vector<1x256xf32>
    %86 = arith.select %82, %84, %85 : vector<1x256xi1>, vector<1x256xf32>
    %c1_i32_27 = arith.constant 1 : i32
    %87 = vector.broadcast %c1_i32_27 : i32 to vector<1x256xi32>
    %88 = arith.addi %37, %87 : vector<1x256xi32>
    %c0_i32_28 = arith.constant 0 : i32
    %89 = vector.broadcast %c0_i32_28 : i32 to vector<1x256xi32>
    %90 = arith.cmpi sge, %88, %89 : vector<1x256xi32>
    %c1_i32_29 = arith.constant 1 : i32
    %91 = vector.broadcast %c1_i32_29 : i32 to vector<1x256xi32>
    %92 = arith.addi %37, %91 : vector<1x256xi32>
    %c16_i32_30 = arith.constant 16 : i32
    %93 = vector.broadcast %c16_i32_30 : i32 to vector<1x256xi32>
    %94 = arith.cmpi slt, %92, %93 : vector<1x256xi32>
    %95 = arith.andi %90, %94 : vector<1x256xi1>
    %cst_31 = arith.constant 0.000000e+00 : f32
    %96 = vector.broadcast %cst_31 : f32 to vector<1x256xf32>
    %97 = arith.select %95, %35, %96 : vector<1x256xi1>, vector<1x256xf32>
    %98 = tpu.iota {dimensions = array<i32: 0>} : vector<16x256xi32>
    %99 = vector.broadcast %37 : vector<1x256xi32> to vector<16x256xi32>
    %100 = arith.subi %98, %99 : vector<16x256xi32>
    %c0_i32_32 = arith.constant 0 : i32
    %101 = vector.broadcast %c0_i32_32 : i32 to vector<16x256xi32>
    %102 = arith.cmpi eq, %100, %101 : vector<16x256xi32>
    %cst_33 = arith.constant 0.000000e+00 : f32
    %103 = vector.shape_cast %86 : vector<1x256xf32> to vector<1x256xf32>
    %104 = vector.broadcast %103 : vector<1x256xf32> to vector<16x256xf32>
    %105 = vector.broadcast %cst_33 : f32 to vector<16x256xf32>
    %106 = arith.select %102, %104, %105 : vector<16x256xi1>, vector<16x256xf32>
    %c1_i32_34 = arith.constant 1 : i32
    %107 = vector.broadcast %c1_i32_34 : i32 to vector<16x256xi32>
    %108 = arith.cmpi eq, %100, %107 : vector<16x256xi32>
    %cst_35 = arith.constant 0.000000e+00 : f32
    %109 = vector.shape_cast %97 : vector<1x256xf32> to vector<1x256xf32>
    %110 = vector.broadcast %109 : vector<1x256xf32> to vector<16x256xf32>
    %111 = vector.broadcast %cst_35 : f32 to vector<16x256xf32>
    %112 = arith.select %108, %110, %111 : vector<16x256xi1>, vector<16x256xf32>
    %113 = arith.addf %106, %112 : vector<16x256xf32>
    %114 = vector.shape_cast %77 : vector<64x256xf32> to vector<4x16x256xf32>
    %115 = vector.shape_cast %113 : vector<16x256xf32> to vector<1x16x256xf32>
    %116 = vector.broadcast %115 : vector<1x16x256xf32> to vector<4x16x256xf32>
    %117 = arith.mulf %114, %116 : vector<4x16x256xf32>
    %cst_36 = arith.constant dense<0.000000e+00> : vector<4x256xf32>
    %118 = vector.multi_reduction <add>, %117, %cst_36 [1] : vector<4x16x256xf32> to vector<4x256xf32>
    %c0_37 = arith.constant 0 : index
    %c0_38 = arith.constant 0 : index
    %c0_39 = arith.constant 0 : index
    %119 = vector.load %arg4[%c0_37, %c0_38, %c0_39] : memref<1x4x256xf32, #tpu.memory_space<vmem>>, vector<1x4x256xf32>
    %120 = vector.shape_cast %119 : vector<1x4x256xf32> to vector<4x256xf32>
    %121 = vector.shape_cast %118 : vector<4x256xf32> to vector<1x4x256xf32>
    tpu.vector_store %arg4[%c0_37, %c0_38, %c0_39], %121 {strides = array<i32>} : memref<1x4x256xf32, #tpu.memory_space<vmem>>, vector<1x4x256xf32>,
    return
  }
  func.func @transform_0(%arg0: i32, %arg1: i32) -> (i32, i32, i32) {
    %c0_i32 = arith.constant 0 : i32
    %c0_i32_0 = arith.constant 0 : i32
    %c0_i32_1 = arith.constant 0 : i32
    return %arg0, %c0_i32, %c0_i32_0 : i32, i32, i32
  }
  func.func @transform_1(%arg0: i32, %arg1: i32) -> (i32, i32, i32) {
    %c0_i32 = arith.constant 0 : i32
    %c0_i32_0 = arith.constant 0 : i32
    return %arg0, %c0_i32, %arg1 : i32, i32, i32
  }
  func.func @transform_2(%arg0: i32, %arg1: i32) -> (i32, i32, i32) {
    %c0_i32 = arith.constant 0 : i32
    %c0_i32_0 = arith.constant 0 : i32
    return %arg0, %c0_i32, %arg1 : i32, i32, i32
  }
}

</mosaic_0001>

<llo_original>
// kernel: tpu_custom_call.1
$region0: #{tpu_custom_call.1}
  #allocation0 [shape = 'u32[]', space=smem, size = 0x4, offset = 0x4, fixed_abs, tag = 'smem constant byte address 0x4 - core index']
  #allocation1 [shape = 'u32[72,128]{1,0:T(1,128)}', space=vmem, size = 0x9000, scoped, tag = 'internal scratch']
  %s0 = inlined_call_operand.vmem [shape: f32[2,64,16], index: 0, kind: input, shape index: {}]
  %s1 = inlined_call_operand.vmem [shape: f32[2,2,256], index: 1, kind: input, shape index: {}]
  %s2 = inlined_call_operand.hbm [shape: f32[2,4,256], index: 2, kind: output, shape index: {}]
  %s3 = sld [smem:[#allocation0]]
  $region41: #{tpu_custom_call.1} parent=0
    _
  %s5 = ssub.s32 1, %s3
  %s6 = scalar_select 0, %s5, %s3
  $region1: #{tpu_custom_call.1} parent=0
    #allocation2 [shape = 'u8[8192]{0}', space=vmem, size = 0x2000, scoped, tag = 'output window, operand 0']
    #allocation3 [shape = 's32[2]{0}', space=sflag, size = 0x8, scoped, tag = 'scoped memory for tpu_custom_call.1']
    %7 = vsyncpa [#allocation3], 0
    %s8 = scalar_lea.sflag [#allocation3], 1
    %9 = vsyncpa %s8, 0
    loop: start=0, step=1, limit=4
    $region2: #{tpu_custom_call.1} parent=1 // loop_pre_header
      _
    $region3: #{tpu_custom_call.1} parent=1 // loop_header
      %s11 = sphi 0, %s15
      %p12 = scmp.ge.s32.totalorder %s11, 4
      %s18 = sphi 0, %s30
      %s19 = sphi 0, %s26
      %s20 = sphi 0, %s18
      %s21 = sphi 0, %s19
      %s22 = sphi 0, %s20
      %s23 = sphi 0, %s21
      %s33 = sphi 0, %s35
      %s36 = sphi 0, %s33
      %s37 = sphi 0, %s36
      %s53 = sphi 0, %s37
      %s61 = sphi 0, %s63
      %s64 = sphi 0, %s61
      %s65 = sphi 0, %s64
      %s81 = sphi 0, %s65
      %s89 = sphi 0, %s91
      %s92 = sphi 0, %s89
      %s93 = sphi 0, %s92
      %s109 = sphi 0, %s93
    $region4: #{tpu_custom_call.1} parent=1 // loop_header_branch
      %14 = sbr.rel (%p12) target = $region8
    $region5: #{tpu_custom_call.1} parent=1 // loop_body
      %s16 = ssub.s32 %s11, 1
      %s17 = ssub.s32 %s11, 2
      %s24 = sadd.s32 1, %s19
      %p25 = scmp.ge.s32.totalorder %s24, 1
      %s26 = scalar_select %p25, 0, %s24
      %s27 = sadd.s32 1, %s18
      %s28 = scalar_select %p25, %s27, %s18
      %p29 = scmp.ge.s32.totalorder %s28, 2
      %s30 = scalar_select %p29, 0, %s28
      %s31 = ssub.s32 %s18, %s30
      %p32 = scmp.eq.s32.totalorder %s31, 0
      %s34 = sadd.s32 %s33, 1
      %s35 = scalar_select %p32, %s33, %s34
      %p38 = pneg %p32
      %p39 = scmp.eq.s32.totalorder %s11, 1
      %p40 = por %p38, %p39
      %p41 = scmp.ne.s32.totalorder %s33, %s36
      %p42 = scmp.eq.s32.totalorder %s11, 0
      %p43 = por %p41, %p42
      %p44 = scmp.ne.s32.totalorder %s33, %s36
      %p45 = scmp.eq.s32.totalorder %s16, 1
      %p46 = por %p44, %p45
      %p47 = scmp.ne.s32.totalorder %s36, %s37
      %p48 = scmp.eq.s32.totalorder %s16, 0
      %p49 = por %p47, %p48
      %p50 = scmp.ne.s32.totalorder %s36, %s37
      %p51 = scmp.eq.s32.totalorder %s17, 1
      %p52 = por %p50, %p51
      %p54 = scmp.ne.s32.totalorder %s37, %s53
      %p55 = scmp.eq.s32.totalorder %s17, 0
      %p56 = por %p54, %p55
      %s57 = ssub.s32 %s18, %s30
      %s58 = ssub.s32 %s19, %s26
      %s59 = sor.u32 %s57, %s58
      %p60 = scmp.eq.s32.totalorder %s59, 0
      %s62 = sadd.s32 %s61, 1
      %s63 = scalar_select %p60, %s61, %s62
      %p66 = pneg %p60
      %p67 = scmp.eq.s32.totalorder %s11, 1
      %p68 = por %p66, %p67
      %p69 = scmp.ne.s32.totalorder %s61, %s64
      %p70 = scmp.eq.s32.totalorder %s11, 0
      %p71 = por %p69, %p70
      %p72 = scmp.ne.s32.totalorder %s61, %s64
      %p73 = scmp.eq.s32.totalorder %s16, 1
      %p74 = por %p72, %p73
      %p75 = scmp.ne.s32.totalorder %s64, %s65
      %p76 = scmp.eq.s32.totalorder %s16, 0
      %p77 = por %p75, %p76
      %p78 = scmp.ne.s32.totalorder %s64, %s65
      %p79 = scmp.eq.s32.totalorder %s17, 1
      %p80 = por %p78, %p79
      %p82 = scmp.ne.s32.totalorder %s65, %s81
      %p83 = scmp.eq.s32.totalorder %s17, 0
      %p84 = por %p82, %p83
      %s85 = ssub.s32 %s18, %s30
      %s86 = ssub.s32 %s19, %s26
      %s87 = sor.u32 %s85, %s86
      %p88 = scmp.eq.s32.totalorder %s87, 0
      %s90 = sadd.s32 %s89, 1
      %s91 = scalar_select %p88, %s89, %s90
      %p94 = pneg %p88
      %p95 = scmp.eq.s32.totalorder %s11, 1
      %p96 = por %p94, %p95
      %p97 = scmp.ne.s32.totalorder %s89, %s92
      %p98 = scmp.eq.s32.totalorder %s11, 0
      %p99 = por %p97, %p98
      %p100 = scmp.ne.s32.totalorder %s89, %s92
      %p101 = scmp.eq.s32.totalorder %s16, 1
      %p102 = por %p100, %p101
      %p103 = scmp.ne.s32.totalorder %s92, %s93
      %p104 = scmp.eq.s32.totalorder %s16, 0
      %p105 = por %p103, %p104
      %p106 = scmp.ne.s32.totalorder %s92, %s93
      %p107 = scmp.eq.s32.totalorder %s17, 1
      %p108 = por %p106, %p107
      %p110 = scmp.ne.s32.totalorder %s93, %s109
      %p111 = scmp.eq.s32.totalorder %s17, 0
      %p112 = por %p110, %p111
      %p113 = scmp.le.s32.totalorder 1, %s11
      %p114 = scmp.lt.s32.totalorder %s11, 3
      %p115 = pnand %p113, %p114
      %p116 = pneg %p115
      // Predicated region
      $region9: #{tpu_custom_call.1} parent=5 // pred_check
        _
      $region10: #{tpu_custom_call.1} parent=5 // pred_check_branch
        %118 = sbr.rel (%p115) target = $region12
      $region11: #{tpu_custom_call.1} parent=5 // pred_region
        %s119 = ssub.s32 %s11, 1
      $region12: #{tpu_custom_call.1} parent=5 // pred_fallthru
        _
      %p120 = scmp.lt.s32.totalorder %s11, 2
      // Predicated region
      $region13: #{tpu_custom_call.1} parent=5 // pred_check
        %p121 = pneg %p120
      $region14: #{tpu_custom_call.1} parent=5 // pred_check_branch
        %123 = sbr.rel (%p121) target = $region16
      $region15: #{tpu_custom_call.1} parent=5 // pred_region
        // Predicated region
        $region17: #{tpu_custom_call.1} parent=15 // pred_check
          %p124 = pneg %p43
        $region18: #{tpu_custom_call.1} parent=15 // pred_check_branch
          %126 = sbr.rel (%p124) target = $region20
        $region19: #{tpu_custom_call.1} parent=15 // pred_region
          %p127 = scmp.lt.s32.totalorder %s18, 1
          %s128 = scalar_select %p127, %s18, 1
          %s129 = smul.addr %s128, 8
          %s130 = smul.addr %s129, 8
          %s131 = scalar_lea.vmem %s0, %s130
        $region20: #{tpu_custom_call.1} parent=15 // pred_fallthru
          _
        // Predicated region
        $region21: #{tpu_custom_call.1} parent=15 // pred_check
          %p132 = pneg %p71
        $region22: #{tpu_custom_call.1} parent=15 // pred_check_branch
          %134 = sbr.rel (%p132) target = $region24
        $region23: #{tpu_custom_call.1} parent=15 // pred_region
          %s135 = smul.u32 2, %s19
          %p136 = scmp.lt.s32.totalorder %s18, 1
          %s137 = scalar_select %p136, %s18, 1
          %p138 = scmp.lt.s32.totalorder %s135, 1
          %s139 = scalar_select %p138, %s135, 1
          %s140 = smul.addr %s137, 2
          %s141 = sadd.s32 %s139, %s140
          %s142 = smul.addr %s141, 2
          %s143 = scalar_lea.vmem %s1, %s142
          %s144 = smul.u32 2, %s19
        $region24: #{tpu_custom_call.1} parent=15 // pred_fallthru
          _
      $region16: #{tpu_custom_call.1} parent=5 // pred_fallthru
        _
      %p145 = scmp.le.s32.totalorder 1, %s11
      %p146 = scmp.lt.s32.totalorder %s11, 3
      %p147 = pnand %p145, %p146
      %p148 = pneg %p147
      // Predicated region
      $region25: #{tpu_custom_call.1} parent=5 // pred_check
        _
      $region26: #{tpu_custom_call.1} parent=5 // pred_check_branch
        %150 = sbr.rel (%p147) target = $region28
      $region27: #{tpu_custom_call.1} parent=5 // pred_region
        %s151 = ssub.s32 %s11, 1
        %p152 = scmp.lt.s32.totalorder %s20, 1
        %s153 = scalar_select %p152, %s20, 1
        %s154 = smul.addr %s153, 8
        %s155 = smul.addr %s154, 8
        %s156 = scalar_lea.vmem %s0, %s155
        %p157 = pneg %p49
        %p158 = pneg %p46
        %s159 = smul.u32 2, %s21
        %p160 = scmp.lt.s32.totalorder %s20, 1
        %s161 = scalar_select %p160, %s20, 1
        %p162 = scmp.lt.s32.totalorder %s159, 1
        %s163 = scalar_select %p162, %s159, 1
        %s164 = smul.addr %s161, 2
        %s165 = sadd.s32 %s163, %s164
        %s166 = smul.addr %s165, 2
        %s167 = scalar_lea.vmem %s1, %s166
        %p168 = pneg %p77
        %p169 = pneg %p74
        %p170 = pneg %p105
        %p171 = pneg %p102
        %s172 = sand.u32 %s92, 1
        %s173 = scalar_lea.sflag [#allocation3], %s172
        %s174 = sand.u32 %s92, 1
        %s175 = smul.addr %s174, 8
        %s176 = scalar_lea.vmem [#allocation2], %s175
        %p177 = scmp.lt.s32.totalorder %s20, 1
        %s178 = scalar_select %p177, %s20, 1
        %s179 = smul.addr %s178, 8
        %s180 = smul.addr %s179, 8
        %s181 = scalar_lea.vmem %s0, %s180
        %s182 = smul.u32 2, %s21
        %p183 = scmp.lt.s32.totalorder %s20, 1
        %s184 = scalar_select %p183, %s20, 1
        %p185 = scmp.lt.s32.totalorder %s182, 1
        %s186 = scalar_select %p185, %s182, 1
        %s187 = smul.addr %s184, 2
        %s188 = sadd.s32 %s186, %s187
        %s189 = smul.addr %s188, 2
        %s190 = scalar_lea.vmem %s1, %s189
        %s191 = smul.u32 2, %s21
        %s192 = smul.u32 2, %s21
        %v193 = vld [vmem:[%s190] sm:$0xf]
        %v194 = vlaneseq
        %v195 = vand.u32 %v194, 127
        %v196 = vadd.s32 %v195, 128
        %s197 = smul.u32 %s21, 256
        %v198 = vstv %s197
        %v199 = vadd.s32 %v195, %v198
        %v200 = vadd.s32 %v196, %v198
        %v201 = vcvt.s32.f32 %v199
        %v202 = vcvt.s32.f32 %v200
        %v203 = vrcp.pop 16.0
        %v204 = vmul.f32 16.0, %v203
        %v205 = vsub.f32 1.0, %v204
        %v206 = vmul.f32 %v203, %v205
        %v207 = vadd.f32 %v203, %v206
        %vm208 = vweird.f32 %v203
        %v209 = vsel %vm208, %v203, %v207
        %v210 = vmul.f32 %v201, %v209
        %v211 = vmul.f32 %v202, %v209
        %v212 = vfloor.f32 %v210
        %v213 = vfloor.f32 %v211
        %v214 = vmul.f32 %v212, 16.0
        %v215 = vmul.f32 %v213, 16.0
        %v216 = vsub.f32 %v201, %v214
        %v217 = vsub.f32 %v202, %v215
        %vm218 = vcmp.lt.f32.partialorder %v216, 0.0
        %vm219 = vcmp.lt.f32.partialorder %v217, 0.0
        %v220 = vsub.f32 %v212, 1.0
        %v221 = vsub.f32 %v213, 1.0
        %v222 = vsel %vm218, %v220, %v212
        %v223 = vsel %vm219, %v221, %v213
        %v224 = vadd.f32 %v216, 16.0
        %v225 = vadd.f32 %v217, 16.0
        %v226 = vsel %vm218, %v224, %v216
        %v227 = vsel %vm219, %v225, %v217
        %vm228 = vcmp.ge.f32.partialorder %v226, 16.0
        %vm229 = vcmp.ge.f32.partialorder %v227, 16.0
        %v230 = vadd.f32 %v222, 1.0
        %v231 = vadd.f32 %v223, 1.0
        %v232 = vsel %vm228, %v230, %v222
        %v233 = vsel %vm229, %v231, %v223
        %v234 = vsub.f32 %v226, 16.0
        %v235 = vsub.f32 %v227, 16.0
        %v236 = vsel %vm228, %v234, %v226
        %v237 = vsel %vm229, %v235, %v227
        %v239 = vperm.slane %v193, 0
        %v240 = vperm.slane %v193, 2
        %v243 = vadd.f32 %v232, %v239
        %v244 = vadd.f32 %v233, %v240
        %v245 = vperm.slane %v193, 1
        %v246 = vperm.slane %v193, 3
        %v249 = vadd.f32 %v236, %v245
        %v250 = vadd.f32 %v237, %v246
        %v251 = vfloor.f32 %v243
        %v252 = vfloor.f32 %v244
        %v253 = vfloor.f32 %v249
        %v254 = vfloor.f32 %v250
        %v255 = vsub.f32 %v243, %v251
        %v256 = vsub.f32 %v244, %v252
        %v257 = vsub.f32 %v249, %v253
        %v258 = vsub.f32 %v250, %v254
        %v259 = vcvt.f32.s32.to.zero.pseudo %v251
        %v260 = vcvt.f32.s32.to.zero.pseudo %v252
        %v261 = vcvt.f32.s32.to.zero.pseudo %v253
        %v262 = vcvt.f32.s32.to.zero.pseudo %v254
        %vm263 = vcmp.ge.s32.totalorder %v261, 0
        %vm264 = vcmp.ge.s32.totalorder %v262, 0
        %vm265 = vcmp.lt.s32.totalorder %v261, 16
        %vm266 = vcmp.lt.s32.totalorder %v262, 16
        %vm267 = vmand %vm263, %vm265
        %vm268 = vmand %vm264, %vm266
        %v269 = vsub.f32 1.0, %v257
        %v270 = vsub.f32 1.0, %v258
        %v271 = vsel %vm267, %v269, 0.0
        %v272 = vsel %vm268, %v270, 0.0
        %v273 = vadd.s32 %v261, 1
        %v274 = vadd.s32 %v262, 1
        %vm275 = vcmp.ge.s32.totalorder %v273, 0
        %vm276 = vcmp.ge.s32.totalorder %v274, 0
        %vm277 = vcmp.lt.s32.totalorder %v273, 16
        %vm278 = vcmp.lt.s32.totalorder %v274, 16
        %vm279 = vmand %vm275, %vm277
        %vm280 = vmand %vm276, %vm278
        %v281 = vsel %vm279, %v257, 0.0
        %v282 = vsel %vm280, %v258, 0.0
        %v283 = vlaneseq
        %v284 = vshrl.u32 %v283, 7
        %v285 = vadd.s32 %v284, 8
        %v286 = vperm.slane %v261, 0
        %v287 = vperm.slane %v262, 0
        %v288 = vsub.s32 %v284, %v286
        %v289 = vsub.s32 %v284, %v287
        %v290 = vsub.s32 %v285, %v286
        %v291 = vsub.s32 %v285, %v287
        %vm292 = vcmp.eq.s32.totalorder %v288, 0
        %vm293 = vcmp.eq.s32.totalorder %v289, 0
        %vm294 = vcmp.eq.s32.totalorder %v290, 0
        %vm295 = vcmp.eq.s32.totalorder %v291, 0
        %v296 = vperm.slane %v271, 0
        %v297 = vperm.slane %v272, 0
        %v298 = vsel %vm292, %v296, 0.0
        %v299 = vsel %vm293, %v297, 0.0
        %v300 = vsel %vm294, %v296, 0.0
        %v301 = vsel %vm295, %v297, 0.0
        %vm302 = vcmp.eq.s32.totalorder %v288, 1
        %vm303 = vcmp.eq.s32.totalorder %v289, 1
        %vm304 = vcmp.eq.s32.totalorder %v290, 1
        %vm305 = vcmp.eq.s32.totalorder %v291, 1
        %v306 = vperm.slane %v281, 0
        %v307 = vperm.slane %v282, 0
        %v308 = vsel %vm302, %v306, 0.0
        %v309 = vsel %vm303, %v307, 0.0
        %v310 = vsel %vm304, %v306, 0.0
        %v311 = vsel %vm305, %v307, 0.0
        %v312 = vadd.f32 %v298, %v308
        %v313 = vadd.f32 %v299, %v309
        %v314 = vadd.f32 %v300, %v310
        %v315 = vadd.f32 %v301, %v311
        %v316 = vld [vmem:[%s181] sm:$0xff]
        %v317 = vld [vmem:[%s181 + $0x8] sm:$0xff]
        %v318 = vld [vmem:[%s181 + $0x10] sm:$0xff]
        %v319 = vld [vmem:[%s181 + $0x18] sm:$0xff]
        %v320 = vld [vmem:[%s181 + $0x20] sm:$0xff]
        %v321 = vld [vmem:[%s181 + $0x28] sm:$0xff]
        %v322 = vld [vmem:[%s181 + $0x30] sm:$0xff]
        %v323 = vld [vmem:[%s181 + $0x38] sm:$0xff]
        %vm324 = vcmask 130048
        %v326 = vsel %vm324, %v316, 0
        %v329 = vsel %vm324, %v317, 0
        %v332 = vsel %vm324, %v318, 0
        %v335 = vsel %vm324, %v319, 0
        %v338 = vsel %vm324, %v320, 0
        %v341 = vsel %vm324, %v321, 0
        %v344 = vsel %vm324, %v322, 0
        %v347 = vsel %vm324, %v323, 0
        %349 = vmatpush.msra.mxu0 0.0
        %350 = vmatpush.msra.mxu0 0.0
        %351 = vmatpush.msra.mxu0 0.0
        %352 = vmatpush.msra.mxu0 0.0
        %353 = vmatpush.msra.mxu0 0.0
        %354 = vmatpush.msra.mxu0 0.0
        %355 = vmatpush.msra.mxu0 0.0
        %356 = vmatpush.msra.mxu0 0.0
        %357 = vmatpush.msra.mxu0 0.0
        %358 = vmatpush.msra.mxu0 0.0
        %359 = vmatpush.msra.mxu0 0.0
        %360 = vmatpush.msra.mxu0 0.0
        %361 = vmatpush.msra.mxu0 0.0
        %362 = vmatpush.msra.mxu0 0.0
        %363 = vmatpush.msra.mxu0 %v314
        %364 = vmatpush.msra.mxu0 %v312
        %365 = vmatmul.f32.gmra.mxu0 %v326
        %v366 = vpop.f32.mrf.mxu0
        %v367 = vadd.f32 0.0, %v366
        %368 = vmatmul.f32.gmra.mxu0 %v329
        %v369 = vpop.f32.mrf.mxu0
        %v370 = vadd.f32 0.0, %v369
        %371 = vmatmul.f32.gmra.mxu0 %v332
        %v372 = vpop.f32.mrf.mxu0
        %v373 = vadd.f32 0.0, %v372
        %374 = vmatmul.f32.gmra.mxu0 %v335
        %v375 = vpop.f32.mrf.mxu0
        %v376 = vadd.f32 0.0, %v375
        %377 = vmatmul.f32.gmra.mxu0 %v338
        %v378 = vpop.f32.mrf.mxu0
        %v379 = vadd.f32 0.0, %v378
        %380 = vmatmul.f32.gmra.mxu0 %v341
        %v381 = vpop.f32.mrf.mxu0
        %v382 = vadd.f32 0.0, %v381
        %383 = vmatmul.f32.gmra.mxu0 %v344
        %v384 = vpop.f32.mrf.mxu0
        %v385 = vadd.f32 0.0, %v384
        %386 = vmatmul.f32.gmra.mxu0 %v347
        %v387 = vpop.f32.mrf.mxu0
        %v388 = vadd.f32 0.0, %v387
        %389 = vdwg.mxu0
        %390 = vmatpush.msra.mxu0 0.0
        %391 = vmatpush.msra.mxu0 0.0
        %392 = vmatpush.msra.mxu0 0.0
        %393 = vmatpush.msra.mxu0 0.0
        %394 = vmatpush.msra.mxu0 0.0
        %395 = vmatpush.msra.mxu0 0.0
        %396 = vmatpush.msra.mxu0 0.0
        %397 = vmatpush.msra.mxu0 0.0
        %398 = vmatpush.msra.mxu0 0.0
        %399 = vmatpush.msra.mxu0 0.0
        %400 = vmatpush.msra.mxu0 0.0
        %401 = vmatpush.msra.mxu0 0.0
        %402 = vmatpush.msra.mxu0 0.0
        %403 = vmatpush.msra.mxu0 0.0
        %404 = vmatpush.msra.mxu0 %v315
        %405 = vmatpush.msra.mxu0 %v313
        %406 = vmatmul.f32.gmra.mxu0 %v326
        %v407 = vpop.f32.mrf.mxu0
        %v408 = vadd.f32 0.0, %v407
        %409 = vmatmul.f32.gmra.mxu0 %v329
        %v410 = vpop.f32.mrf.mxu0
        %v411 = vadd.f32 0.0, %v410
        %412 = vmatmul.f32.gmra.mxu0 %v332
        %v413 = vpop.f32.mrf.mxu0
        %v414 = vadd.f32 0.0, %v413
        %415 = vmatmul.f32.gmra.mxu0 %v335
        %v416 = vpop.f32.mrf.mxu0
        %v417 = vadd.f32 0.0, %v416
        %418 = vmatmul.f32.gmra.mxu0 %v338
        %v419 = vpop.f32.mrf.mxu0
        %v420 = vadd.f32 0.0, %v419
        %421 = vmatmul.f32.gmra.mxu0 %v341
        %v422 = vpop.f32.mrf.mxu0
        %v423 = vadd.f32 0.0, %v422
        %424 = vmatmul.f32.gmra.mxu0 %v344
        %v425 = vpop.f32.mrf.mxu0
        %v426 = vadd.f32 0.0, %v425
        %427 = vmatmul.f32.gmra.mxu0 %v347
        %v428 = vpop.f32.mrf.mxu0
        %v429 = vadd.f32 0.0, %v428
        %430 = vdwg.mxu0
        %vm431 = vcmp.ge.s32.totalorder %v259, 0
        %vm432 = vcmp.ge.s32.totalorder %v260, 0
        %vm433 = vcmp.lt.s32.totalorder %v259, 16
        %vm434 = vcmp.lt.s32.totalorder %v260, 16
        %vm435 = vmand %vm431, %vm433
        %vm436 = vmand %vm432, %vm434
        %v437 = vsub.f32 1.0, %v255
        %v438 = vsub.f32 1.0, %v256
        %v439 = vsel %vm435, %v437, 0.0
        %v440 = vsel %vm436, %v438, 0.0
        %v441 = vadd.s32 %v259, 1
        %v442 = vadd.s32 %v260, 1
        %vm443 = vcmp.ge.s32.totalorder %v441, 0
        %vm444 = vcmp.ge.s32.totalorder %v442, 0
        %vm445 = vcmp.lt.s32.totalorder %v441, 16
        %vm446 = vcmp.lt.s32.totalorder %v442, 16
        %vm447 = vmand %vm443, %vm445
        %vm448 = vmand %vm444, %vm446
        %v449 = vsel %vm447, %v255, 0.0
        %v450 = vsel %vm448, %v256, 0.0
        %v451 = vperm.slane %v259, 0
        %v452 = vperm.slane %v260, 0
        %v453 = vsub.s32 %v284, %v451
        %v454 = vsub.s32 %v284, %v452
        %v455 = vsub.s32 %v285, %v451
        %v456 = vsub.s32 %v285, %v452
        %vm457 = vcmp.eq.s32.totalorder %v453, 0
        %vm458 = vcmp.eq.s32.totalorder %v454, 0
        %vm459 = vcmp.eq.s32.totalorder %v455, 0
        %vm460 = vcmp.eq.s32.totalorder %v456, 0
        %v461 = vperm.slane %v439, 0
        %v462 = vperm.slane %v440, 0
        %v463 = vsel %vm457, %v461, 0.0
        %v464 = vsel %vm458, %v462, 0.0
        %v465 = vsel %vm459, %v461, 0.0
        %v466 = vsel %vm460, %v462, 0.0
        %vm467 = vcmp.eq.s32.totalorder %v453, 1
        %vm468 = vcmp.eq.s32.totalorder %v454, 1
        %vm469 = vcmp.eq.s32.totalorder %v455, 1
        %vm470 = vcmp.eq.s32.totalorder %v456, 1
        %v471 = vperm.slane %v449, 0
        %v472 = vperm.slane %v450, 0
        %v473 = vsel %vm467, %v471, 0.0
        %v474 = vsel %vm468, %v472, 0.0
        %v475 = vsel %vm469, %v471, 0.0
        %v476 = vsel %vm470, %v472, 0.0
        %v477 = vadd.f32 %v463, %v473
        %v478 = vadd.f32 %v464, %v474
        %v479 = vadd.f32 %v465, %v475
        %v480 = vadd.f32 %v466, %v476
        %v481 = vmul.f32 %v367, %v477
        %v482 = vmul.f32 %v408, %v478
        %v483 = vmul.f32 %v370, %v479
        %v484 = vmul.f32 %v411, %v480
        %v485 = vmul.f32 %v373, %v477
        %v486 = vmul.f32 %v414, %v478
        %v487 = vmul.f32 %v376, %v479
        %v488 = vmul.f32 %v417, %v480
        %v489 = vmul.f32 %v379, %v477
        %v490 = vmul.f32 %v420, %v478
        %v491 = vmul.f32 %v382, %v479
        %v492 = vmul.f32 %v423, %v480
        %v493 = vmul.f32 %v385, %v477
        %v494 = vmul.f32 %v426, %v478
        %v495 = vmul.f32 %v388, %v479
        %v496 = vmul.f32 %v429, %v480
        %v497 = vadd.f32 %v481, %v483
        %v498 = vrot.slane %v497, 4
        %v499 = vadd.f32 %v497, %v498
        %v500 = vrot.slane %v499, 2
        %v501 = vadd.f32 %v499, %v500
        %v502 = vrot.slane %v501, 1
        %v503 = vadd.f32 %v501, %v502
        %v504 = vadd.f32 %v482, %v484
        %v505 = vrot.slane %v504, 4
        %v506 = vadd.f32 %v504, %v505
        %v507 = vrot.slane %v506, 2
        %v508 = vadd.f32 %v506, %v507
        %v509 = vrot.slane %v508, 1
        %v510 = vadd.f32 %v508, %v509
        %v511 = vadd.f32 %v485, %v487
        %v512 = vrot.slane %v511, 4
        %v513 = vadd.f32 %v511, %v512
        %v514 = vrot.slane %v513, 2
        %v515 = vadd.f32 %v513, %v514
        %v516 = vrot.slane %v515, 1
        %v517 = vadd.f32 %v515, %v516
        %v518 = vadd.f32 %v486, %v488
        %v519 = vrot.slane %v518, 4
        %v520 = vadd.f32 %v518, %v519
        %v521 = vrot.slane %v520, 2
        %v522 = vadd.f32 %v520, %v521
        %v523 = vrot.slane %v522, 1
        %v524 = vadd.f32 %v522, %v523
        %v525 = vadd.f32 %v489, %v491
        %v526 = vrot.slane %v525, 4
        %v527 = vadd.f32 %v525, %v526
        %v528 = vrot.slane %v527, 2
        %v529 = vadd.f32 %v527, %v528
        %v530 = vrot.slane %v529, 1
        %v531 = vadd.f32 %v529, %v530
        %v532 = vadd.f32 %v490, %v492
        %v533 = vrot.slane %v532, 4
        %v534 = vadd.f32 %v532, %v533
        %v535 = vrot.slane %v534, 2
        %v536 = vadd.f32 %v534, %v535
        %v537 = vrot.slane %v536, 1
        %v538 = vadd.f32 %v536, %v537
        %v539 = vadd.f32 %v493, %v495
        %v540 = vrot.slane %v539, 4
        %v541 = vadd.f32 %v539, %v540
        %v542 = vrot.slane %v541, 2
        %v543 = vadd.f32 %v541, %v542
        %v544 = vrot.slane %v543, 1
        %v545 = vadd.f32 %v543, %v544
        %v546 = vadd.f32 %v494, %v496
        %v547 = vrot.slane %v546, 4
        %v548 = vadd.f32 %v546, %v547
        %v549 = vrot.slane %v548, 2
        %v550 = vadd.f32 %v548, %v549
        %v551 = vrot.slane %v550, 1
        %v552 = vadd.f32 %v550, %v551
        %v561 = vrot.slane %v510, 4
        %v562 = vrot.slane %v524, 4
        %v563 = vrot.slane %v538, 4
        %v564 = vrot.slane %v552, 4
        %vm565 = vcmask 1043456
        %v566 = vsel %vm565, %v503, %v561
        %v567 = vsel %vm565, %v517, %v562
        %v568 = vsel %vm565, %v531, %v563
        %v569 = vsel %vm565, %v545, %v564
        %v570 = vrot.slane %v567, 7
        %vm571 = vcmask 1041409
        %v572 = vsel %vm571, %v570, %v566
        %vm573 = vcmask 1045509
        %v574 = vsel %vm573, %v570, %v572
        %v575 = vrot.slane %v568, 6
        %vm576 = vcmask 1042434
        %v577 = vsel %vm576, %v575, %v574
        %vm578 = vcmask 1046534
        %v579 = vsel %vm578, %v575, %v577
        %v580 = vrot.slane %v569, 5
        %vm581 = vcmask 1043459
        %v582 = vsel %vm581, %v580, %v579
        %vm583 = vcmask 1047559
        %v584 = vsel %vm583, %v580, %v582
        %586 = vst [vmem:[%s176] sm:$0xff] %v584
        %s587 = sand.u32 %s92, 1
        %s588 = scalar_lea.sflag [#allocation3], %s587
        %s589 = sand.u32 %s92, 1
        %s590 = smul.addr %s589, 8
        %s591 = scalar_lea.vmem [#allocation2], %s590
        // Predicated region
        $region29: #{tpu_custom_call.1} parent=27 // pred_check
          %p592 = pneg %p102
        $region30: #{tpu_custom_call.1} parent=27 // pred_check_branch
          %594 = sbr.rel (%p592) target = $region32
        $region31: #{tpu_custom_call.1} parent=27 // pred_region
          %s595 = smul.u32 2, %s21
          %597 = vsyncadd %s588, 0
          %s598 = smul.addr %s20, 2
          %s599 = sadd.s32 %s595, %s598
          %s600 = smul.addr %s599, 4
          %s601 = scalar_lea.hbm %s2, %s600
          %s603 = sshll.u32 %s591, 4
          %s604 = int_to_ptr.vmem [resolvable:$true] %s603
          %s605 = sshll.u32 %s601, 4
          %s606 = int_to_ptr.hbm [resolvable:$true] %s605
          %608 = dma.vmem_to_hbm [thread:$0]  %s604, 128, %s606, %s588
        $region32: #{tpu_custom_call.1} parent=27 // pred_fallthru
          _
      $region28: #{tpu_custom_call.1} parent=5 // pred_fallthru
        _
      %p609 = scmp.le.s32.totalorder 2, %s11
      // Predicated region
      $region33: #{tpu_custom_call.1} parent=5 // pred_check
        %p610 = pneg %p609
      $region34: #{tpu_custom_call.1} parent=5 // pred_check_branch
        %612 = sbr.rel (%p610) target = $region36
      $region35: #{tpu_custom_call.1} parent=5 // pred_region
        %s613 = ssub.s32 %s11, 2
        // Predicated region
        $region37: #{tpu_custom_call.1} parent=35 // pred_check
          %p614 = pneg %p108
        $region38: #{tpu_custom_call.1} parent=35 // pred_check_branch
          %616 = sbr.rel (%p614) target = $region40
        $region39: #{tpu_custom_call.1} parent=35 // pred_region
          %s617 = sand.u32 %s93, 1
          %s618 = scalar_lea.sflag [#allocation3], %s617
          %s619 = sand.u32 %s93, 1
          %s620 = smul.addr %s619, 8
          %s621 = scalar_lea.vmem [#allocation2], %s620
          %623 = dma.done %s618, 128
        $region40: #{tpu_custom_call.1} parent=35 // pred_fallthru
          _
      $region36: #{tpu_custom_call.1} parent=5 // pred_fallthru
        _
    $region6: #{tpu_custom_call.1} parent=1 // loop_footer
      %s15 = sadd.s32 1, %s11
    $region7: #{tpu_custom_call.1} parent=1 // loop_footer_branch
      %10 = sbr.rel target = $region3
    $region8: #{tpu_custom_call.1} parent=1 // loop_exit
      _
    %624 = vsyncpa [#allocation3], 1
    %s625 = scalar_lea.sflag [#allocation3], 1
    %626 = vsyncpa %s625, 1

</llo_original>
